<compile_context>
chip_gen: v5e
topology: v5e:2x2
jax: 0.10.0
libtpu: 0.0.40
codegen_flags: <defaults>
</compile_context>

<pallas_src>
import math

import numpy as np
import jax
import jax.numpy as jnp
from jax import lax
from jax.experimental import pallas as pl
from jax.experimental.pallas import tpu as pltpu

EPS = 1e-5          # RevIN eps
_LANE = 128
_SUBLANE = 8


def _round_up(v, m):
    return ((v + m - 1) // m) * m


def _vmem_capacity_bytes():
    """Physical per-core VMEM (falls back to the smallest real chip, v7x)."""
    try:
        info = pltpu.get_tpu_info()
        for attr in ("vmem_capacity_bytes", "vmem_bytes", "vmem_size_bytes"):
            v = getattr(info, attr, None)
            if v:
                return int(v)
    except Exception:
        pass
    return 64 * 1024 * 1024


def _choose_tiles(B, C, L, Lp, Hp, Pp, wbytes, budget, batch_tile, channel_chunk):
    """Pick (Bt, Cc) so the per-step working set fits the VMEM budget.

    Shrinks the channel chunk first (streams the projection weight through the
    reduction axis, keeps projection M = Bt full), then the batch tile.
    """
    b_cap = _round_up(B, _SUBLANE)
    if batch_tile is not None:
        Bt = max(_SUBLANE, _round_up(min(int(batch_tile), b_cap), _SUBLANE))
    else:
        Bt = min(b_cap, 128)
    Cc = max(1, min(int(channel_chunk), C)) if channel_chunk is not None else C

    def fits(bt, cc):
        rows = cc * bt
        est = (8 * rows * max(Lp, Hp) * 4            # live f32 intermediates
               + 2 * rows * L * 4                    # double-buffered x tile
               + 2 * cc * Lp * Pp * wbytes           # double-buffered proj chunk
               + 2 * (L * Lp + Lp * Hp + Hp * Lp) * wbytes   # conv/fc weights
               + 3 * bt * Pp * 4                     # out block + accumulator
               + 8 * rows * 4)                       # RevIN per-row params
        return est <= budget

    while not fits(Bt, Cc):
        if Cc > 1:
            Cc = max(1, (Cc + 1) // 2)
        elif Bt > _SUBLANE:
            Bt = max(_SUBLANE, Bt // 2)
        else:
            break
    return Bt, Cc


def _paifilter_kernel(x_ref, wc_ref, w1_ref, b1_ref, w2_ref, b2_ref,
                      aw_ref, ab_ref, iaw_ref, pw_ref, pb_ref,
                      out_ref, acc_ref):
    cc = pl.program_id(1)
    n_cc = pl.num_programs(1)
    Cc, Bt, L = x_ref.shape
    cdt = wc_ref.dtype                                     # matmul compute dtype

    # [Cc, Bt, L] -> [Cc*Bt, L]; Bt % 8 == 0 so this is a layout-free collapse.
    x = x_ref[...].reshape(Cc * Bt, L)

    # ---- RevIN 'norm' (stats over time, ddof=0 i.e. unbiased=False) ---------
    mean = jnp.mean(x, axis=1, keepdims=True)              # [Cc*Bt, 1]
    xc = x - mean
    var = jnp.mean(xc * xc, axis=1, keepdims=True)
    s = var + EPS
    rstd = lax.rsqrt(s)                                    # EUP
    stdev = s * rstd                                       # = sqrt(s), no 2nd EUP op
    xn = xc * (rstd * aw_ref[...]) + ab_ref[...]           # [Cc*Bt, L]

    # ---- circular convolution as circulant matmul (MXU) ---------------------
    y = jnp.dot(xn.astype(cdt), wc_ref[...],
                preferred_element_type=jnp.float32)        # [Cc*Bt, Lp]

    # ---- fc: Linear(L,H) -> LeakyReLU(0.01) -> Linear(H,L) ------------------
    h = jnp.dot(y.astype(cdt), w1_ref[...],
                preferred_element_type=jnp.float32) + b1_ref[...]
    h = jnp.where(h >= 0, h, 0.01 * h)
    o = jnp.dot(h.astype(cdt), w2_ref[...],
                preferred_element_type=jnp.float32) + b2_ref[...]

    # ---- RevIN 'denorm' (divides folded into precomputed multiplies) --------
    xd = (o - ab_ref[...]) * iaw_ref[...] * stdev + mean   # [Cc*Bt, Lp]

    # ---- projection contribution: single K = Cc*Lp contraction --------------
    # Lane-concatenate the per-channel row slabs (128-aligned boundaries) so the
    # chunk projection is one MXU matmul instead of Cc accumulated M=Bt pushes.
    if Cc == 1:
        xflat = xd
    else:
        xflat = jnp.concatenate(
            [xd[c * Bt:(c + 1) * Bt, :] for c in range(Cc)], axis=1)
    contrib = jnp.dot(xflat.astype(cdt), pw_ref[...],
                      preferred_element_type=jnp.float32)  # [Bt, Pp]

    @pl.when(cc == 0)
    def _init():
        acc_ref[...] = jnp.zeros_like(acc_ref)

    acc_ref[...] += contrib

    @pl.when(cc == n_cc - 1)
    def _finalize():
        out_ref[...] = acc_ref[...] + pb_ref[...]


def paifilter_forward(x, x_mark_enc, x_dec, x_mark_dec, params, mask=None,
                      batch_tile=None, channel_chunk=None,
                      compute_dtype=jnp.bfloat16):
    """x: [B, L, C] float32 (PyTorch layout).  Returns [B, pred_len]."""
    del x_mark_enc, x_dec, x_mark_dec, mask       # unused by the forward pass
    B, L, C = x.shape
    H = params["fc1_w"].shape[1]
    P = params["proj_b"].shape[0]

    Lp = _round_up(L, _LANE)
    Hp = _round_up(H, _LANE)
    Pp = _round_up(P, _LANE)
    wbytes = jnp.dtype(compute_dtype).itemsize

    vmem_cap = _vmem_capacity_bytes()
    vmem_limit = int(vmem_cap * 0.85)             # leave compiler scratch headroom
    budget = int(vmem_cap * 0.55)
    Bt, Cc = _choose_tiles(B, C, L, Lp, Hp, Pp, wbytes, budget,
                           batch_tile, channel_chunk)

    Bpad = _round_up(B, Bt)
    G = Bpad // Bt
    Cpad = _round_up(C, Cc)
    n_cc = Cpad // Cc

    # ---- wrapper-side glue (plain JAX): ONE transpose + zero padding --------
    x_cl = jnp.transpose(x, (2, 0, 1)).astype(jnp.float32)       # [C, B, L]
    x_cl = jnp.pad(x_cl, ((0, Cpad - C), (0, Bpad - B), (0, 0)))  # [Cpad,Bpad,L]

    # Circulant weight for the ortho rfft/irfft circular convolution.
    w0 = params["w"][0].astype(jnp.float32)                      # [L]
    shift = (jnp.arange(L)[None, :] - jnp.arange(L)[:, None]) % L
    wcirc = w0[shift] / math.sqrt(L)                             # [L, L]
    wcirc = jnp.pad(wcirc, ((0, 0), (0, Lp - L))).astype(compute_dtype)

    w1 = jnp.pad(params["fc1_w"].astype(jnp.float32),
                 ((0, Lp - L), (0, Hp - H))).astype(compute_dtype)
    b1 = jnp.pad(params["fc1_b"].astype(jnp.float32), (0, Hp - H))[None, :]
    w2 = jnp.pad(params["fc2_w"].astype(jnp.float32),
                 ((0, Hp - H), (0, Lp - L))).astype(compute_dtype)
    b2 = jnp.pad(params["fc2_b"].astype(jnp.float32), (0, Lp - L))[None, :]

    # Projection weight: flat index l*C + c  ->  [C, L, P] -> pad -> [Cpad*Lp, Pp]
    pw3 = params["proj_w"].reshape(L, C, P).transpose(1, 0, 2)
    pw3 = jnp.pad(pw3.astype(jnp.float32),
                  ((0, Cpad - C), (0, Lp - L), (0, Pp - P)))
    pw2 = pw3.reshape(Cpad * Lp, Pp).astype(compute_dtype)
    pb = jnp.pad(params["proj_b"].astype(jnp.float32), (0, Pp - P))[None, :]

    # RevIN affine params, repeated per batch tile row (row r = c_local*Bt + b).
    rev_w = jnp.pad(params["rev_w"].astype(jnp.float32), (0, Cpad - C),
                    constant_values=1.0)
    rev_b = jnp.pad(params["rev_b"].astype(jnp.float32), (0, Cpad - C))
    aw = jnp.repeat(rev_w[:, None], Bt, axis=0)                  # [Cpad*Bt, 1]
    ab = jnp.repeat(rev_b[:, None], Bt, axis=0)
    iaw = 1.0 / (aw + EPS * EPS)                                 # param-only

    args = (x_cl, wcirc, w1, b1, w2, b2, aw, ab, iaw, pw2, pb)

    rows = Bpad * Cpad
    cost = pl.CostEstimate(
        flops=int(2 * rows * (L * Lp + Lp * Hp + Hp * Lp + Lp * Pp)
                  + 12 * rows * Lp),
        transcendentals=int(rows),
        bytes_accessed=int(4 * (rows * L + Bpad * Pp + 6 * Cpad * Bt)
                           + wbytes * (L * Lp + Lp * Hp + Hp * Lp
                                       + G * Cpad * Lp * Pp)),
    )

    def const_spec(shape):
        zeros = (0,) * len(shape)
        return pl.BlockSpec(shape, lambda g, c, _z=zeros: _z)

    out = pl.pallas_call(
        _paifilter_kernel,
        out_shape=jax.ShapeDtypeStruct((Bpad, Pp), jnp.float32),
        grid_spec=pltpu.PrefetchScalarGridSpec(
            num_scalar_prefetch=0,
            grid=(G, n_cc),
            in_specs=[
                pl.BlockSpec((Cc, Bt, L), lambda g, c: (c, g, 0)),   # x tile
                const_spec((L, Lp)),                                  # circulant W
                const_spec((Lp, Hp)),                                 # fc1 weight
                const_spec((1, Hp)),                                  # fc1 bias
                const_spec((Hp, Lp)),                                 # fc2 weight
                const_spec((1, Lp)),                                  # fc2 bias
                pl.BlockSpec((Cc * Bt, 1), lambda g, c: (c, 0)),      # RevIN w rows
                pl.BlockSpec((Cc * Bt, 1), lambda g, c: (c, 0)),      # RevIN b rows
                pl.BlockSpec((Cc * Bt, 1), lambda g, c: (c, 0)),      # 1/(w+eps^2)
                pl.BlockSpec((Cc * Lp, Pp), lambda g, c: (c, 0)),     # proj chunk
                const_spec((1, Pp)),                                  # proj bias
            ],
            out_specs=pl.BlockSpec((Bt, Pp), lambda g, c: (g, 0)),
            scratch_shapes=[pltpu.VMEM((Bt, Pp), jnp.float32)],
        ),
        compiler_params=pltpu.CompilerParams(
            dimension_semantics=("parallel", "arbitrary"),
            vmem_limit_bytes=vmem_limit),
        cost_estimate=cost,
    )(*args)

    return out[:B, :P]


def init_params(key, L, C, H, P):
    """Deterministic synthetic init matching the module's parameter shapes."""
    ks = jax.random.split(key, 8)
    u = lambda k, shape, fan_in: jax.random.uniform(
        k, shape, jnp.float32, -1.0 / math.sqrt(fan_in), 1.0 / math.sqrt(fan_in))
    return {
        "w": 0.02 * jax.random.normal(ks[0], (1, L), jnp.float32),
        "fc1_w": u(ks[1], (L, H), L),
        "fc1_b": u(ks[2], (H,), L),
        "fc2_w": u(ks[3], (H, L), H),
        "fc2_b": u(ks[4], (L,), H),
        "proj_w": u(ks[5], (C * L, P), C * L),
        "proj_b": u(ks[6], (P,), C * L),
        "rev_w": jnp.ones((C,), jnp.float32),     # RevIN affine_weight init
        "rev_b": jnp.zeros((C,), jnp.float32),    # RevIN affine_bias init
    }


def reference_forward(x, params):
    """Pure-JAX reference using the actual rfft/irfft path (semantics check)."""
    B, L, C = x.shape
    mean = x.mean(axis=1, keepdims=True)
    std = jnp.sqrt(x.var(axis=1, keepdims=True) + EPS)
    z = (x - mean) / std * params["rev_w"] + params["rev_b"]
    xt = jnp.transpose(z, (0, 2, 1))                              # [B, C, L]
    Xf = jnp.fft.rfft(xt, axis=2, norm="ortho")
    Wf = jnp.fft.rfft(params["w"], axis=1, norm="ortho")          # [1, L//2+1]
    y = jnp.fft.irfft(Xf * Wf[None], n=L, axis=2, norm="ortho")
    h = y @ params["fc1_w"] + params["fc1_b"]
    h = jnp.where(h >= 0, h, 0.01 * h)
    o = h @ params["fc2_w"] + params["fc2_b"]                     # [B, C, L]
    xb = jnp.transpose(o, (0, 2, 1))                              # [B, L, C]
    xd = (xb - params["rev_b"]) / (params["rev_w"] + EPS * EPS) * std + mean
    flat = xd.reshape(B, -1)
    return flat @ params["proj_w"] + params["proj_b"]


if __name__ == "__main__":
    key = jax.random.PRNGKey(0)

    cases = [
        # B,  L,  C, H,  P,  compute dtype, batch_tile, channel_chunk, rtol, atol
        (2,  16, 4, 32, 8,  jnp.float32,  None, None, 2e-3, 1e-3),  # baseline f32
        (12, 16, 4, 32, 8,  jnp.bfloat16, 8,    None, 5e-2, 5e-2),  # multi-tile grid + bf16
        (4,  24, 3, 48, 40, jnp.float32,  None, 2,    2e-3, 1e-3),  # channel-chunk reduction axis
    ]

    for i, (B, L, C, H, P, cdt, bt, ccnk, rtol, atol) in enumerate(cases):
        kx, kp = jax.random.split(jax.random.fold_in(key, i))
        x = jax.random.normal(kx, (B, L, C), dtype=jnp.float32)
        x_mark_enc = jnp.zeros((B, L, 4), jnp.float32)   # unused by forward
        x_dec = jnp.zeros((B, P, C), jnp.float32)        # unused by forward
        x_mark_dec = jnp.zeros((B, P, 4), jnp.float32)   # unused by forward
        params = init_params(kp, L, C, H, P)

        out = paifilter_forward(x, x_mark_enc, x_dec, x_mark_dec, params,
                                batch_tile=bt, channel_chunk=ccnk,
                                compute_dtype=cdt)
        out = jax.block_until_ready(out)
        assert out.shape == (B, P)

        ref = reference_forward(x, params)
        np.testing.assert_allclose(np.asarray(out), np.asarray(ref),
                                   rtol=rtol, atol=atol)

    print("KERNEL_OK")
</pallas_src>

<mosaic_0001>
module attributes {stable_mosaic.version = 11 : i64} {
  func.func @_paifilter_kernel(%arg0: i32, %arg1: i32, %arg2: memref<4x8x16xf32, #tpu.memory_space<vmem>>, %arg3: memref<16x128xf32, #tpu.memory_space<vmem>>, %arg4: memref<128x128xf32, #tpu.memory_space<vmem>>, %arg5: memref<1x128xf32, #tpu.memory_space<vmem>>, %arg6: memref<128x128xf32, #tpu.memory_space<vmem>>, %arg7: memref<1x128xf32, #tpu.memory_space<vmem>>, %arg8: memref<32x1xf32, #tpu.memory_space<vmem>>, %arg9: memref<32x1xf32, #tpu.memory_space<vmem>>, %arg10: memref<32x1xf32, #tpu.memory_space<vmem>>, %arg11: memref<512x128xf32, #tpu.memory_space<vmem>>, %arg12: memref<1x128xf32, #tpu.memory_space<vmem>>, %arg13: memref<8x128xf32, #tpu.memory_space<vmem>>, %arg14: memref<8x128xf32, #tpu.memory_space<vmem>>) attributes {dimension_semantics = [#tpu.dimension_semantics<parallel>, #tpu.dimension_semantics<arbitrary>], iteration_bounds = array<i64: 1, 1>, scalar_prefetch = 0 : i64, scratch_operands = 1 : i64, tpu.core_type = #tpu.core_type<tc>, window_params = [{transform_indices = @transform_0, window_bounds = array<i64: 4, 8, 16>}, {pipeline_mode = #tpu.pipeline_mode<synchronous>, transform_indices = @transform_1, window_bounds = array<i64: 16, 128>}, {pipeline_mode = #tpu.pipeline_mode<synchronous>, transform_indices = @transform_2, window_bounds = array<i64: 128, 128>}, {pipeline_mode = #tpu.pipeline_mode<synchronous>, transform_indices = @transform_3, window_bounds = array<i64: 1, 128>}, {pipeline_mode = #tpu.pipeline_mode<synchronous>, transform_indices = @transform_4, window_bounds = array<i64: 128, 128>}, {pipeline_mode = #tpu.pipeline_mode<synchronous>, transform_indices = @transform_5, window_bounds = array<i64: 1, 128>}, {transform_indices = @transform_6, window_bounds = array<i64: 32, 1>}, {transform_indices = @transform_7, window_bounds = array<i64: 32, 1>}, {transform_indices = @transform_8, window_bounds = array<i64: 32, 1>}, {transform_indices = @transform_9, window_bounds = array<i64: 512, 128>}, {pipeline_mode = #tpu.pipeline_mode<synchronous>, transform_indices = @transform_10, window_bounds = array<i64: 1, 128>}, {transform_indices = @transform_11, window_bounds = array<i64: 8, 128>}]} {
    %c0 = arith.constant 0 : index
    %c0_0 = arith.constant 0 : index
    %c0_1 = arith.constant 0 : index
    %0 = vector.load %arg2[%c0, %c0_0, %c0_1] : memref<4x8x16xf32, #tpu.memory_space<vmem>>, vector<4x8x16xf32>
    %1 = vector.shape_cast %0 : vector<4x8x16xf32> to vector<32x16xf32>
    %cst = arith.constant dense<0.000000e+00> : vector<32xf32>
    %2 = vector.multi_reduction <add>, %1, %cst [1] : vector<32x16xf32> to vector<32xf32>
    %3 = vector.shape_cast %2 : vector<32xf32> to vector<32x1xf32>
    %cst_2 = arith.constant 1.600000e+01 : f32
    %4 = vector.broadcast %cst_2 : f32 to vector<32x1xf32>
    %5 = arith.divf %3, %4 : vector<32x1xf32>
    %6 = vector.broadcast %5 : vector<32x1xf32> to vector<32x16xf32>
    %7 = arith.subf %1, %6 : vector<32x16xf32>
    %8 = arith.mulf %7, %7 : vector<32x16xf32>
    %cst_3 = arith.constant dense<0.000000e+00> : vector<32xf32>
    %9 = vector.multi_reduction <add>, %8, %cst_3 [1] : vector<32x16xf32> to vector<32xf32>
    %10 = vector.shape_cast %9 : vector<32xf32> to vector<32x1xf32>
    %cst_4 = arith.constant 1.600000e+01 : f32
    %11 = vector.broadcast %cst_4 : f32 to vector<32x1xf32>
    %12 = arith.divf %10, %11 : vector<32x1xf32>
    %cst_5 = arith.constant 9.99999974E-6 : f32
    %13 = vector.broadcast %cst_5 : f32 to vector<32x1xf32>
    %14 = arith.addf %12, %13 : vector<32x1xf32>
    %15 = math.rsqrt %14 : vector<32x1xf32>
    %16 = arith.mulf %14, %15 : vector<32x1xf32>
    %c0_6 = arith.constant 0 : index
    %c0_7 = arith.constant 0 : index
    %17 = vector.load %arg8[%c0_6, %c0_7] : memref<32x1xf32, #tpu.memory_space<vmem>>, vector<32x1xf32>
    %18 = arith.mulf %15, %17 : vector<32x1xf32>
    %19 = vector.broadcast %18 : vector<32x1xf32> to vector<32x16xf32>
    %20 = arith.mulf %7, %19 : vector<32x16xf32>
    %c0_8 = arith.constant 0 : index
    %c0_9 = arith.constant 0 : index
    %21 = vector.load %arg9[%c0_8, %c0_9] : memref<32x1xf32, #tpu.memory_space<vmem>>, vector<32x1xf32>
    %22 = vector.broadcast %21 : vector<32x1xf32> to vector<32x16xf32>
    %23 = arith.addf %20, %22 : vector<32x16xf32>
    %c0_10 = arith.constant 0 : index
    %c0_11 = arith.constant 0 : index
    %24 = vector.load %arg3[%c0_10, %c0_11] : memref<16x128xf32, #tpu.memory_space<vmem>>, vector<16x128xf32>
    %cst_12 = arith.constant dense<0.000000e+00> : vector<32x128xf32>
    %25 = tpu.matmul %23, %24, %cst_12 {dimension_numbers = #tpu.dot_dimension_numbers<[1], [0], [0], [1], [0, 0, 1, 1], [], []>} : vector<32x16xf32>, vector<16x128xf32>, vector<32x128xf32> -> vector<32x128xf32>
    %c0_13 = arith.constant 0 : index
    %c0_14 = arith.constant 0 : index
    %26 = vector.load %arg4[%c0_13, %c0_14] : memref<128x128xf32, #tpu.memory_space<vmem>>, vector<128x128xf32>
    %cst_15 = arith.constant dense<0.000000e+00> : vector<32x128xf32>
    %27 = tpu.matmul %25, %26, %cst_15 {dimension_numbers = #tpu.dot_dimension_numbers<[1], [0], [0], [1], [0, 0, 1, 1], [], []>} : vector<32x128xf32>, vector<128x128xf32>, vector<32x128xf32> -> vector<32x128xf32>
    %c0_16 = arith.constant 0 : index
    %c0_17 = arith.constant 0 : index
    %28 = vector.load %arg5[%c0_16, %c0_17] : memref<1x128xf32, #tpu.memory_space<vmem>>, vector<1x128xf32>
    %29 = vector.broadcast %28 : vector<1x128xf32> to vector<32x128xf32>
    %30 = arith.addf %27, %29 : vector<32x128xf32>
    %cst_18 = arith.constant 0.000000e+00 : f32
    %31 = vector.broadcast %cst_18 : f32 to vector<32x128xf32>
    %32 = arith.cmpf oge, %30, %31 : vector<32x128xf32>
    %cst_19 = arith.constant 0.00999999977 : f32
    %33 = vector.broadcast %cst_19 : f32 to vector<32x128xf32>
    %34 = arith.mulf %33, %30 : vector<32x128xf32>
    %35 = arith.select %32, %30, %34 : vector<32x128xi1>, vector<32x128xf32>
    %c0_20 = arith.constant 0 : index
    %c0_21 = arith.constant 0 : index
    %36 = vector.load %arg6[%c0_20, %c0_21] : memref<128x128xf32, #tpu.memory_space<vmem>>, vector<128x128xf32>
    %cst_22 = arith.constant dense<0.000000e+00> : vector<32x128xf32>
    %37 = tpu.matmul %35, %36, %cst_22 {dimension_numbers = #tpu.dot_dimension_numbers<[1], [0], [0], [1], [0, 0, 1, 1], [], []>} : vector<32x128xf32>, vector<128x128xf32>, vector<32x128xf32> -> vector<32x128xf32>
    %c0_23 = arith.constant 0 : index
    %c0_24 = arith.constant 0 : index
    %38 = vector.load %arg7[%c0_23, %c0_24] : memref<1x128xf32, #tpu.memory_space<vmem>>, vector<1x128xf32>
    %39 = vector.broadcast %38 : vector<1x128xf32> to vector<32x128xf32>
    %40 = arith.addf %37, %39 : vector<32x128xf32>
    %c0_25 = arith.constant 0 : index
    %c0_26 = arith.constant 0 : index
    %41 = vector.load %arg9[%c0_25, %c0_26] : memref<32x1xf32, #tpu.memory_space<vmem>>, vector<32x1xf32>
    %42 = vector.broadcast %41 : vector<32x1xf32> to vector<32x128xf32>
    %43 = arith.subf %40, %42 : vector<32x128xf32>
    %c0_27 = arith.constant 0 : index
    %c0_28 = arith.constant 0 : index
    %44 = vector.load %arg10[%c0_27, %c0_28] : memref<32x1xf32, #tpu.memory_space<vmem>>, vector<32x1xf32>
    %45 = vector.broadcast %44 : vector<32x1xf32> to vector<32x128xf32>
    %46 = arith.mulf %43, %45 : vector<32x128xf32>
    %47 = vector.broadcast %16 : vector<32x1xf32> to vector<32x128xf32>
    %48 = arith.mulf %46, %47 : vector<32x128xf32>
    %49 = vector.broadcast %5 : vector<32x1xf32> to vector<32x128xf32>
    %50 = arith.addf %48, %49 : vector<32x128xf32>
    %51 = vector.extract_strided_slice %50 {offsets = [0, 0], sizes = [8, 128], strides = [1, 1]} : vector<32x128xf32> to vector<8x128xf32>
    %52 = vector.extract_strided_slice %50 {offsets = [8, 0], sizes = [8, 128], strides = [1, 1]} : vector<32x128xf32> to vector<8x128xf32>
    %53 = vector.extract_strided_slice %50 {offsets = [16, 0], sizes = [8, 128], strides = [1, 1]} : vector<32x128xf32> to vector<8x128xf32>
    %54 = vector.extract_strided_slice %50 {offsets = [24, 0], sizes = [8, 128], strides = [1, 1]} : vector<32x128xf32> to vector<8x128xf32>
    %55 = tpu.concatenate %51, %52, %53, %54 in 1 : vector<8x128xf32>, vector<8x128xf32>, vector<8x128xf32>, vector<8x128xf32> -> vector<8x512xf32>
    %c0_29 = arith.constant 0 : index
    %c0_30 = arith.constant 0 : index
    %56 = vector.load %arg11[%c0_29, %c0_30] : memref<512x128xf32, #tpu.memory_space<vmem>>, vector<512x128xf32>
    %cst_31 = arith.constant dense<0.000000e+00> : vector<8x128xf32>
    %57 = tpu.matmul %55, %56, %cst_31 {dimension_numbers = #tpu.dot_dimension_numbers<[1], [0], [0], [1], [0, 0, 1, 1], [], []>} : vector<8x512xf32>, vector<512x128xf32>, vector<8x128xf32> -> vector<8x128xf32>
    %c0_i32 = arith.constant 0 : i32
    %58 = arith.cmpi eq, %arg1, %c0_i32 : i32
    %59 = arith.extui %58 : i1 to i32
    %c0_i32_32 = arith.constant 0 : i32
    %60 = arith.cmpi ne, %59, %c0_i32_32 : i32
    scf.if %60 {
      %cst_39 = arith.constant 0.000000e+00 : f32
      %67 = vector.broadcast %cst_39 : f32 to vector<8x128xf32>
      %c0_40 = arith.constant 0 : index
      %c0_41 = arith.constant 0 : index
      %68 = vector.load %arg14[%c0_40, %c0_41] : memref<8x128xf32, #tpu.memory_space<vmem>>, vector<8x128xf32>
      tpu.vector_store %arg14[%c0_40, %c0_41], %67 {strides = array<i32>} : memref<8x128xf32, #tpu.memory_space<vmem>>, vector<8x128xf32>,
    } else {
    }
    %c0_33 = arith.constant 0 : index
    %c0_34 = arith.constant 0 : index
    %61 = vector.load %arg14[%c0_33, %c0_34] : memref<8x128xf32, #tpu.memory_space<vmem>>, vector<8x128xf32>
    %62 = arith.addf %61, %57 : vector<8x128xf32>
    %c0_35 = arith.constant 0 : index
    %c0_36 = arith.constant 0 : index
    %63 = vector.load %arg14[%c0_35, %c0_36] : memref<8x128xf32, #tpu.memory_space<vmem>>, vector<8x128xf32>
    tpu.vector_store %arg14[%c0_35, %c0_36], %62 {strides = array<i32>} : memref<8x128xf32, #tpu.memory_space<vmem>>, vector<8x128xf32>,
    %c0_i32_37 = arith.constant 0 : i32
    %64 = arith.cmpi eq, %arg1, %c0_i32_37 : i32
    %65 = arith.extui %64 : i1 to i32
    %c0_i32_38 = arith.constant 0 : i32
    %66 = arith.cmpi ne, %65, %c0_i32_38 : i32
    scf.if %66 {
      %c0_39 = arith.constant 0 : index
      %c0_40 = arith.constant 0 : index
      %67 = vector.load %arg14[%c0_39, %c0_40] : memref<8x128xf32, #tpu.memory_space<vmem>>, vector<8x128xf32>
      %c0_41 = arith.constant 0 : index
      %c0_42 = arith.constant 0 : index
      %68 = vector.load %arg12[%c0_41, %c0_42] : memref<1x128xf32, #tpu.memory_space<vmem>>, vector<1x128xf32>
      %69 = vector.broadcast %68 : vector<1x128xf32> to vector<8x128xf32>
      %70 = arith.addf %67, %69 : vector<8x128xf32>
      %c0_43 = arith.constant 0 : index
      %c0_44 = arith.constant 0 : index
      %71 = vector.load %arg13[%c0_43, %c0_44] : memref<8x128xf32, #tpu.memory_space<vmem>>, vector<8x128xf32>
      tpu.vector_store %arg13[%c0_43, %c0_44], %70 {strides = array<i32>} : memref<8x128xf32, #tpu.memory_space<vmem>>, vector<8x128xf32>,
    } else {
    }
    return
  }
  func.func @transform_0(%arg0: i32, %arg1: i32) -> (i32, i32, i32) {
    %c0_i32 = arith.constant 0 : i32
    %c0_i32_0 = arith.constant 0 : i32
    return %arg1, %arg0, %c0_i32 : i32, i32, i32
  }
  func.func @transform_1(%arg0: i32, %arg1: i32) -> (i32, i32) {
    %c0_i32 = arith.constant 0 : i32
    %c0_i32_0 = arith.constant 0 : i32
    %c0_i32_1 = arith.constant 0 : i32
    return %c0_i32, %c0_i32_0 : i32, i32
  }
  func.func @transform_2(%arg0: i32, %arg1: i32) -> (i32, i32) {
    %c0_i32 = arith.constant 0 : i32
    %c0_i32_0 = arith.constant 0 : i32
    %c0_i32_1 = arith.constant 0 : i32
    return %c0_i32, %c0_i32_0 : i32, i32
  }
  func.func @transform_3(%arg0: i32, %arg1: i32) -> (i32, i32) {
    %c0_i32 = arith.constant 0 : i32
    %c0_i32_0 = arith.constant 0 : i32
    %c0_i32_1 = arith.constant 0 : i32
    return %c0_i32, %c0_i32_0 : i32, i32
  }
  func.func @transform_4(%arg0: i32, %arg1: i32) -> (i32, i32) {
    %c0_i32 = arith.constant 0 : i32
    %c0_i32_0 = arith.constant 0 : i32
    %c0_i32_1 = arith.constant 0 : i32
    return %c0_i32, %c0_i32_0 : i32, i32
  }
  func.func @transform_5(%arg0: i32, %arg1: i32) -> (i32, i32) {
    %c0_i32 = arith.constant 0 : i32
    %c0_i32_0 = arith.constant 0 : i32
    %c0_i32_1 = arith.constant 0 : i32
    return %c0_i32, %c0_i32_0 : i32, i32
  }
  func.func @transform_6(%arg0: i32, %arg1: i32) -> (i32, i32) {
    %c0_i32 = arith.constant 0 : i32
    %c0_i32_0 = arith.constant 0 : i32
    return %arg1, %c0_i32 : i32, i32
  }
  func.func @transform_7(%arg0: i32, %arg1: i32) -> (i32, i32) {
    %c0_i32 = arith.constant 0 : i32
    %c0_i32_0 = arith.constant 0 : i32
    return %arg1, %c0_i32 : i32, i32
  }
  func.func @transform_8(%arg0: i32, %arg1: i32) -> (i32, i32) {
    %c0_i32 = arith.constant 0 : i32
    %c0_i32_0 = arith.constant 0 : i32
    return %arg1, %c0_i32 : i32, i32
  }
  func.func @transform_9(%arg0: i32, %arg1: i32) -> (i32, i32) {
    %c0_i32 = arith.constant 0 : i32
    %c0_i32_0 = arith.constant 0 : i32
    return %arg1, %c0_i32 : i32, i32
  }
  func.func @transform_10(%arg0: i32, %arg1: i32) -> (i32, i32) {
    %c0_i32 = arith.constant 0 : i32
    %c0_i32_0 = arith.constant 0 : i32
    %c0_i32_1 = arith.constant 0 : i32
    return %c0_i32, %c0_i32_0 : i32, i32
  }
  func.func @transform_11(%arg0: i32, %arg1: i32) -> (i32, i32) {
    %c0_i32 = arith.constant 0 : i32
    %c0_i32_0 = arith.constant 0 : i32
    return %arg0, %c0_i32 : i32, i32
  }
}

</mosaic_0001>

<llo_original>
// kernel: tpu_custom_call.1
$region0: #{tpu_custom_call.1}
  #allocation0 [shape = 'u32[]', space=smem, size = 0x4, offset = 0x4, fixed_abs, tag = 'smem constant byte address 0x4 - core index']
  #allocation1 [shape = 'u32[72,128]{1,0:T(1,128)}', space=vmem, size = 0x9000, scoped, tag = 'internal scratch']
  #allocation2 [shape = 'f32[8,128]{1,0:T(8,128)}', space=vmem, size = 0x1000, scoped, tag = 'scratch operand']
  %s0 = inlined_call_operand.vmem [shape: f32[4,8,16], index: 0, kind: input, shape index: {}]
  %s1 = inlined_call_operand.vmem [shape: f32[16,128], index: 1, kind: input, shape index: {}]
  %s2 = inlined_call_operand.hbm [shape: f32[128,128], index: 2, kind: input, shape index: {}]
  %s3 = inlined_call_operand.vmem [shape: f32[1,128], index: 3, kind: input, shape index: {}]
  %s4 = inlined_call_operand.hbm [shape: f32[128,128], index: 4, kind: input, shape index: {}]
  %s5 = inlined_call_operand.vmem [shape: f32[1,128], index: 5, kind: input, shape index: {}]
  %s6 = inlined_call_operand.vmem [shape: f32[32,1], index: 6, kind: input, shape index: {}]
  %s7 = inlined_call_operand.vmem [shape: f32[32,1], index: 7, kind: input, shape index: {}]
  %s8 = inlined_call_operand.vmem [shape: f32[32,1], index: 8, kind: input, shape index: {}]
  %s9 = inlined_call_operand.hbm [shape: f32[512,128], index: 9, kind: input, shape index: {}]
  %s10 = inlined_call_operand.vmem [shape: f32[1,128], index: 10, kind: input, shape index: {}]
  %s11 = inlined_call_operand.hbm [shape: f32[8,128], index: 11, kind: output, shape index: {}]
  %s12 = sld [smem:[#allocation0]]
  $region74: #{tpu_custom_call.1} parent=0
    _
  %s14 = ssub.s32 1, %s12
  %s15 = scalar_select 0, %s14, %s12
  $region1: #{tpu_custom_call.1} parent=0
    #allocation3 [shape = 'u8[65536]{0}', space=vmem, size = 0x10000, scoped, tag = 'input window, operand 2, single buffered']
    #allocation4 [shape = 's32[1]{0}', space=sflag, size = 0x4, scoped, tag = 'scoped memory for tpu_custom_call.1']
    #allocation5 [shape = 's32[1]{0}', space=sflag, size = 0x4, scoped, tag = 'scoped memory for tpu_custom_call.1']
    #allocation6 [shape = 'u8[65536]{0}', space=vmem, size = 0x10000, scoped, tag = 'input window, operand 4, single buffered']
    #allocation7 [shape = 's32[1]{0}', space=sflag, size = 0x4, scoped, tag = 'scoped memory for tpu_custom_call.1']
    #allocation8 [shape = 'u8[262144]{0}', space=vmem, size = 0x40000, scoped, tag = 'input window, operand 9, single buffered']
    #allocation9 [shape = 'u8[4096]{0}', space=vmem, size = 0x1000, scoped, tag = 'output window, operand 0, single buffered']
    %16 = vsyncpa [#allocation4], 0
    %17 = vsyncpa [#allocation7], 0
    %18 = vsyncpa [#allocation5], 0
    // Predicated region
    $region2: #{tpu_custom_call.1} parent=1 // pred_check
      _
    $region3: #{tpu_custom_call.1} parent=1 // pred_check_branch
      %20 = sbr.rel (0) target = $region5
    $region4: #{tpu_custom_call.1} parent=1 // pred_region
      _
    $region5: #{tpu_custom_call.1} parent=1 // pred_fallthru
      _
    // Predicated region
    $region6: #{tpu_custom_call.1} parent=1 // pred_check
      _
    $region7: #{tpu_custom_call.1} parent=1 // pred_check_branch
      %22 = sbr.rel (0) target = $region9
    $region8: #{tpu_custom_call.1} parent=1 // pred_region
      _
    $region9: #{tpu_custom_call.1} parent=1 // pred_fallthru
      _
    // Predicated region
    $region10: #{tpu_custom_call.1} parent=1 // pred_check
      _
    $region11: #{tpu_custom_call.1} parent=1 // pred_check_branch
      %24 = sbr.rel (0) target = $region13
    $region12: #{tpu_custom_call.1} parent=1 // pred_region
      %26 = vsyncadd [#allocation4], 0
      %s27 = sshll.u32 %s2, 4
      %s28 = int_to_ptr.hbm [resolvable:$true] %s27
      %s29 = sshll.u32 [#allocation3], 4
      %s30 = int_to_ptr.vmem [resolvable:$true] %s29
      %35 = dma.hbm_to_vmem [thread:$0]  %s28, 2048, %s30, [#allocation4], 128, 128, 8
    $region13: #{tpu_custom_call.1} parent=1 // pred_fallthru
      _
    // Predicated region
    $region14: #{tpu_custom_call.1} parent=1 // pred_check
      _
    $region15: #{tpu_custom_call.1} parent=1 // pred_check_branch
      %37 = sbr.rel (0) target = $region17
    $region16: #{tpu_custom_call.1} parent=1 // pred_region
      _
    $region17: #{tpu_custom_call.1} parent=1 // pred_fallthru
      _
    // Predicated region
    $region18: #{tpu_custom_call.1} parent=1 // pred_check
      _
    $region19: #{tpu_custom_call.1} parent=1 // pred_check_branch
      %39 = sbr.rel (0) target = $region21
    $region20: #{tpu_custom_call.1} parent=1 // pred_region
      %41 = vsyncadd [#allocation7], 0
      %s42 = sshll.u32 %s4, 4
      %s43 = int_to_ptr.hbm [resolvable:$true] %s42
      %s44 = sshll.u32 [#allocation6], 4
      %s45 = int_to_ptr.vmem [resolvable:$true] %s44
      %50 = dma.hbm_to_vmem [thread:$0]  %s43, 2048, %s45, [#allocation7], 128, 128, 8
    $region21: #{tpu_custom_call.1} parent=1 // pred_fallthru
      _
    // Predicated region
    $region22: #{tpu_custom_call.1} parent=1 // pred_check
      _
    $region23: #{tpu_custom_call.1} parent=1 // pred_check_branch
      %52 = sbr.rel (0) target = $region25
    $region24: #{tpu_custom_call.1} parent=1 // pred_region
      _
    $region25: #{tpu_custom_call.1} parent=1 // pred_fallthru
      _
    // Predicated region
    $region26: #{tpu_custom_call.1} parent=1 // pred_check
      _
    $region27: #{tpu_custom_call.1} parent=1 // pred_check_branch
      %54 = sbr.rel (0) target = $region29
    $region28: #{tpu_custom_call.1} parent=1 // pred_region
      _
    $region29: #{tpu_custom_call.1} parent=1 // pred_fallthru
      _
    // Predicated region
    $region30: #{tpu_custom_call.1} parent=1 // pred_check
      _
    $region31: #{tpu_custom_call.1} parent=1 // pred_check_branch
      %56 = sbr.rel (0) target = $region33
    $region32: #{tpu_custom_call.1} parent=1 // pred_region
      _
    $region33: #{tpu_custom_call.1} parent=1 // pred_fallthru
      _
    // Predicated region
    $region34: #{tpu_custom_call.1} parent=1 // pred_check
      _
    $region35: #{tpu_custom_call.1} parent=1 // pred_check_branch
      %58 = sbr.rel (0) target = $region37
    $region36: #{tpu_custom_call.1} parent=1 // pred_region
      _
    $region37: #{tpu_custom_call.1} parent=1 // pred_fallthru
      _
    // Predicated region
    $region38: #{tpu_custom_call.1} parent=1 // pred_check
      _
    $region39: #{tpu_custom_call.1} parent=1 // pred_check_branch
      %60 = sbr.rel (0) target = $region41
    $region40: #{tpu_custom_call.1} parent=1 // pred_region
      %62 = vsyncadd [#allocation7], 0
      %s63 = sshll.u32 %s9, 4
      %s64 = int_to_ptr.hbm [resolvable:$true] %s63
      %s65 = sshll.u32 [#allocation8], 4
      %s66 = int_to_ptr.vmem [resolvable:$true] %s65
      %71 = dma.hbm_to_vmem [thread:$0]  %s64, 8192, %s66, [#allocation7], 128, 128, 8
    $region41: #{tpu_custom_call.1} parent=1 // pred_fallthru
      _
    // Predicated region
    $region42: #{tpu_custom_call.1} parent=1 // pred_check
      _
    $region43: #{tpu_custom_call.1} parent=1 // pred_check_branch
      %73 = sbr.rel (0) target = $region45
    $region44: #{tpu_custom_call.1} parent=1 // pred_region
      _
    $region45: #{tpu_custom_call.1} parent=1 // pred_fallthru
      _
    // Predicated region
    $region46: #{tpu_custom_call.1} parent=1 // pred_check
      _
    $region47: #{tpu_custom_call.1} parent=1 // pred_check_branch
      %75 = sbr.rel (0) target = $region49
    $region48: #{tpu_custom_call.1} parent=1 // pred_region
      %77 = dma.done [#allocation4], 2048
    $region49: #{tpu_custom_call.1} parent=1 // pred_fallthru
      _
    // Predicated region
    $region50: #{tpu_custom_call.1} parent=1 // pred_check
      _
    $region51: #{tpu_custom_call.1} parent=1 // pred_check_branch
      %79 = sbr.rel (0) target = $region53
    $region52: #{tpu_custom_call.1} parent=1 // pred_region
      %81 = dma.done [#allocation7], 2048
    $region53: #{tpu_custom_call.1} parent=1 // pred_fallthru
      _
    // Predicated region
    $region54: #{tpu_custom_call.1} parent=1 // pred_check
      _
    $region55: #{tpu_custom_call.1} parent=1 // pred_check_branch
      %83 = sbr.rel (0) target = $region57
    $region56: #{tpu_custom_call.1} parent=1 // pred_region
      %85 = dma.done [#allocation7], 8192
    $region57: #{tpu_custom_call.1} parent=1 // pred_fallthru
      _
    %v86 = vld [vmem:[%s0] sm:$0xff]
    %v87 = vld [vmem:[%s0 + $0x8] sm:$0xff]
    %v88 = vld [vmem:[%s0 + $0x10] sm:$0xff]
    %v89 = vld [vmem:[%s0 + $0x18] sm:$0xff]
    %vm90 = vcmask 130048
    %v91 = vsel %vm90, %v86, 0.0
    %92 = vadd.xlane.f32.xlu0 %v91
    %v93 = vpop.xlane.xlu0 %92
    %v94 = vsel %vm90, %v87, 0.0
    %95 = vadd.xlane.f32.xlu0 %v94
    %v96 = vpop.xlane.xlu0 %95
    %v97 = vsel %vm90, %v88, 0.0
    %98 = vadd.xlane.f32.xlu0 %v97
    %v99 = vpop.xlane.xlu0 %98
    %v100 = vsel %vm90, %v89, 0.0
    %101 = vadd.xlane.f32.xlu0 %v100
    %v102 = vpop.xlane.xlu0 %101
    %v103 = vrcp.pop 16.0
    %v104 = vmul.f32 16.0, %v103
    %v105 = vsub.f32 1.0, %v104
    %v106 = vmul.f32 %v103, %v105
    %v107 = vadd.f32 %v103, %v106
    %vm108 = vweird.f32 %v103
    %v109 = vsel %vm108, %v103, %v107
    %v110 = vmul.f32 %v93, %v109
    %v111 = vmul.f32 %v96, %v109
    %v112 = vmul.f32 %v99, %v109
    %v113 = vmul.f32 %v102, %v109
    %v114 = vsub.f32 %v86, %v110
    %v115 = vsub.f32 %v87, %v111
    %v116 = vsub.f32 %v88, %v112
    %v117 = vsub.f32 %v89, %v113
    %v118 = vmul.f32 %v114, %v114
    %v119 = vmul.f32 %v115, %v115
    %v120 = vmul.f32 %v116, %v116
    %v121 = vmul.f32 %v117, %v117
    %v122 = vsel %vm90, %v118, 0.0
    %123 = vadd.xlane.f32.xlu0 %v122
    %v124 = vpop.xlane.xlu0 %123
    %v125 = vsel %vm90, %v119, 0.0
    %126 = vadd.xlane.f32.xlu0 %v125
    %v127 = vpop.xlane.xlu0 %126
    %v128 = vsel %vm90, %v120, 0.0
    %129 = vadd.xlane.f32.xlu0 %v128
    %v130 = vpop.xlane.xlu0 %129
    %v131 = vsel %vm90, %v121, 0.0
    %132 = vadd.xlane.f32.xlu0 %v131
    %v133 = vpop.xlane.xlu0 %132
    %v134 = vmul.f32 %v124, %v109
    %v135 = vmul.f32 %v127, %v109
    %v136 = vmul.f32 %v130, %v109
    %v137 = vmul.f32 %v133, %v109
    %v138 = vadd.f32 %v134, 1e-05
    %v139 = vadd.f32 %v135, 1e-05
    %v140 = vadd.f32 %v136, 1e-05
    %v141 = vadd.f32 %v137, 1e-05
    %v142 = vrsqrt.pop %v138
    %v143 = vmul.f32 %v142, %v138
    %v144 = vmul.f32 %v143, %v142
    %v145 = vmul.f32 0.5, %v144
    %v146 = vsub.f32 1.5, %v145
    %v147 = vmul.f32 %v142, %v146
    %vm148 = vweird.f32 %v138
    %vm149 = vweird.f32 %v142
    %vm150 = vmor %vm148, %vm149
    %v151 = vsel %vm150, %v142, %v147
    %v152 = vrsqrt.pop %v139
    %v153 = vmul.f32 %v152, %v139
    %v154 = vmul.f32 %v153, %v152
    %v155 = vmul.f32 0.5, %v154
    %v156 = vsub.f32 1.5, %v155
    %v157 = vmul.f32 %v152, %v156
    %vm158 = vweird.f32 %v139
    %vm159 = vweird.f32 %v152
    %vm160 = vmor %vm158, %vm159
    %v161 = vsel %vm160, %v152, %v157
    %v162 = vrsqrt.pop %v140
    %v163 = vmul.f32 %v162, %v140
    %v164 = vmul.f32 %v163, %v162
    %v165 = vmul.f32 0.5, %v164
    %v166 = vsub.f32 1.5, %v165
    %v167 = vmul.f32 %v162, %v166
    %vm168 = vweird.f32 %v140
    %vm169 = vweird.f32 %v162
    %vm170 = vmor %vm168, %vm169
    %v171 = vsel %vm170, %v162, %v167
    %v172 = vrsqrt.pop %v141
    %v173 = vmul.f32 %v172, %v141
    %v174 = vmul.f32 %v173, %v172
    %v175 = vmul.f32 0.5, %v174
    %v176 = vsub.f32 1.5, %v175
    %v177 = vmul.f32 %v172, %v176
    %vm178 = vweird.f32 %v141
    %vm179 = vweird.f32 %v172
    %vm180 = vmor %vm178, %vm179
    %v181 = vsel %vm180, %v172, %v177
    %v182 = vmul.f32 %v138, %v151
    %v183 = vmul.f32 %v139, %v161
    %v184 = vmul.f32 %v140, %v171
    %v185 = vmul.f32 %v141, %v181
    %v186 = vld [vmem:[%s6] sm:$0xff]
    %v187 = vld [vmem:[%s6 + $0x8] sm:$0xff]
    %v188 = vld [vmem:[%s6 + $0x10] sm:$0xff]
    %v189 = vld [vmem:[%s6 + $0x18] sm:$0xff]
    %v190 = vmul.f32 %v151, %v186
    %v191 = vmul.f32 %v161, %v187
    %v192 = vmul.f32 %v171, %v188
    %v193 = vmul.f32 %v181, %v189
    %195 = vset.pattern.permute.xlu0 0
    %196 = vperm.xlu0 %195, %v190
    %v197 = vpop.permute.xlu0 %196
    %200 = vset.pattern.permute.xlu0 0
    %201 = vperm.xlu0 %200, %v191
    %v202 = vpop.permute.xlu0 %201
    %205 = vset.pattern.permute.xlu0 0
    %206 = vperm.xlu0 %205, %v192
    %v207 = vpop.permute.xlu0 %206
    %210 = vset.pattern.permute.xlu0 0
    %211 = vperm.xlu0 %210, %v193
    %v212 = vpop.permute.xlu0 %211
    %v214 = vmul.f32 %v114, %v197
    %v215 = vmul.f32 %v115, %v202
    %v216 = vmul.f32 %v116, %v207
    %v217 = vmul.f32 %v117, %v212
    %v218 = vld [vmem:[%s7] sm:$0xff]
    %v219 = vld [vmem:[%s7 + $0x8] sm:$0xff]
    %v220 = vld [vmem:[%s7 + $0x10] sm:$0xff]
    %v221 = vld [vmem:[%s7 + $0x18] sm:$0xff]
    %223 = vset.pattern.permute.xlu0 0
    %224 = vperm.xlu0 %223, %v218
    %v225 = vpop.permute.xlu0 %224
    %228 = vset.pattern.permute.xlu0 0
    %229 = vperm.xlu0 %228, %v219
    %v230 = vpop.permute.xlu0 %229
    %233 = vset.pattern.permute.xlu0 0
    %234 = vperm.xlu0 %233, %v220
    %v235 = vpop.permute.xlu0 %234
    %238 = vset.pattern.permute.xlu0 0
    %239 = vperm.xlu0 %238, %v221
    %v240 = vpop.permute.xlu0 %239
    %v242 = vadd.f32 %v214, %v225
    %v243 = vadd.f32 %v215, %v230
    %v244 = vadd.f32 %v216, %v235
    %v245 = vadd.f32 %v217, %v240
    %v246 = vld [vmem:[%s1] sm:$0xff]
    %v247 = vld [vmem:[%s1 + $0x8] sm:$0xff]
    %v249 = vsel %vm90, %v242, 0
    %v252 = vsel %vm90, %v243, 0
    %v255 = vsel %vm90, %v244, 0
    %v258 = vsel %vm90, %v245, 0
    %260 = vmatpush.msra.mxu0 0.0
    %261 = vmatpush.msra.mxu0 0.0
    %262 = vmatpush.msra.mxu0 0.0
    %263 = vmatpush.msra.mxu0 0.0
    %264 = vmatpush.msra.mxu0 0.0
    %265 = vmatpush.msra.mxu0 0.0
    %266 = vmatpush.msra.mxu0 0.0
    %267 = vmatpush.msra.mxu0 0.0
    %268 = vmatpush.msra.mxu0 0.0
    %269 = vmatpush.msra.mxu0 0.0
    %270 = vmatpush.msra.mxu0 0.0
    %271 = vmatpush.msra.mxu0 0.0
    %272 = vmatpush.msra.mxu0 0.0
    %273 = vmatpush.msra.mxu0 0.0
    %274 = vmatpush.msra.mxu0 %v247
    %275 = vmatpush.msra.mxu0 %v246
    %276 = vmatmul.f32.gmra.mxu0 %v249
    %v277 = vpop.f32.mrf.mxu0
    %v278 = vadd.f32 0.0, %v277
    %279 = vmatmul.f32.gmra.mxu0 %v252
    %v280 = vpop.f32.mrf.mxu0
    %v281 = vadd.f32 0.0, %v280
    %282 = vmatmul.f32.gmra.mxu0 %v255
    %v283 = vpop.f32.mrf.mxu0
    %v284 = vadd.f32 0.0, %v283
    %285 = vmatmul.f32.gmra.mxu0 %v258
    %v286 = vpop.f32.mrf.mxu0
    %v287 = vadd.f32 0.0, %v286
    %288 = vdwg.mxu0
    %v289 = vld [vmem:[#allocation3] sm:$0xff]
    %v290 = vld [vmem:[#allocation3 + $0x8] sm:$0xff]
    %v291 = vld [vmem:[#allocation3 + $0x10] sm:$0xff]
    %v292 = vld [vmem:[#allocation3 + $0x18] sm:$0xff]
    %v293 = vld [vmem:[#allocation3 + $0x20] sm:$0xff]
    %v294 = vld [vmem:[#allocation3 + $0x28] sm:$0xff]
    %v295 = vld [vmem:[#allocation3 + $0x30] sm:$0xff]
    %v296 = vld [vmem:[#allocation3 + $0x38] sm:$0xff]
    %v297 = vld [vmem:[#allocation3 + $0x40] sm:$0xff]
    %v298 = vld [vmem:[#allocation3 + $0x48] sm:$0xff]
    %v299 = vld [vmem:[#allocation3 + $0x50] sm:$0xff]
    %v300 = vld [vmem:[#allocation3 + $0x58] sm:$0xff]
    %v301 = vld [vmem:[#allocation3 + $0x60] sm:$0xff]
    %v302 = vld [vmem:[#allocation3 + $0x68] sm:$0xff]
    %v303 = vld [vmem:[#allocation3 + $0x70] sm:$0xff]
    %v304 = vld [vmem:[#allocation3 + $0x78] sm:$0xff]
    %v305 = vld [vmem:[%s3] sm:$0x1]
    %v307 = vperm.slane %v305, 0
    %309 = vmatpush.msra.mxu0 %v304
    %310 = vmatpush.msra.mxu0 %v303
    %311 = vmatpush.msra.mxu0 %v302
    %312 = vmatpush.msra.mxu0 %v301
    %313 = vmatpush.msra.mxu0 %v300
    %314 = vmatpush.msra.mxu0 %v299
    %315 = vmatpush.msra.mxu0 %v298
    %316 = vmatpush.msra.mxu0 %v297
    %317 = vmatpush.msra.mxu0 %v296
    %318 = vmatpush.msra.mxu0 %v295
    %319 = vmatpush.msra.mxu0 %v294
    %320 = vmatpush.msra.mxu0 %v293
    %321 = vmatpush.msra.mxu0 %v292
    %322 = vmatpush.msra.mxu0 %v291
    %323 = vmatpush.msra.mxu0 %v290
    %324 = vmatpush.msra.mxu0 %v289
    %325 = vmatmul.f32.gmra.mxu0 %v278
    %v326 = vpop.f32.mrf.mxu0
    %v327 = vadd.f32 %v307, %v326
    %328 = vmatmul.f32.gmra.mxu0 %v281
    %v329 = vpop.f32.mrf.mxu0
    %v330 = vadd.f32 %v307, %v329
    %331 = vmatmul.f32.gmra.mxu0 %v284
    %v332 = vpop.f32.mrf.mxu0
    %v333 = vadd.f32 %v307, %v332
    %334 = vmatmul.f32.gmra.mxu0 %v287
    %v335 = vpop.f32.mrf.mxu0
    %v336 = vadd.f32 %v307, %v335
    %337 = vdwg.mxu0
    %vm338 = vcmp.ge.f32.partialorder %v327, 0.0
    %vm339 = vcmp.ge.f32.partialorder %v330, 0.0
    %vm340 = vcmp.ge.f32.partialorder %v333, 0.0
    %vm341 = vcmp.ge.f32.partialorder %v336, 0.0
    %v342 = vmul.f32 %v327, 0.01
    %v343 = vmul.f32 %v330, 0.01
    %v344 = vmul.f32 %v333, 0.01
    %v345 = vmul.f32 %v336, 0.01
    %v346 = vsel %vm338, %v327, %v342
    %v347 = vsel %vm339, %v330, %v343
    %v348 = vsel %vm340, %v333, %v344
    %v349 = vsel %vm341, %v336, %v345
    %v350 = vld [vmem:[#allocation6] sm:$0xff]
    %v351 = vld [vmem:[#allocation6 + $0x8] sm:$0xff]
    %v352 = vld [vmem:[#allocation6 + $0x10] sm:$0xff]
    %v353 = vld [vmem:[#allocation6 + $0x18] sm:$0xff]
    %v354 = vld [vmem:[#allocation6 + $0x20] sm:$0xff]
    %v355 = vld [vmem:[#allocation6 + $0x28] sm:$0xff]
    %v356 = vld [vmem:[#allocation6 + $0x30] sm:$0xff]
    %v357 = vld [vmem:[#allocation6 + $0x38] sm:$0xff]
    %v358 = vld [vmem:[#allocation6 + $0x40] sm:$0xff]
    %v359 = vld [vmem:[#allocation6 + $0x48] sm:$0xff]
    %v360 = vld [vmem:[#allocation6 + $0x50] sm:$0xff]
    %v361 = vld [vmem:[#allocation6 + $0x58] sm:$0xff]
    %v362 = vld [vmem:[#allocation6 + $0x60] sm:$0xff]
    %v363 = vld [vmem:[#allocation6 + $0x68] sm:$0xff]
    %v364 = vld [vmem:[#allocation6 + $0x70] sm:$0xff]
    %v365 = vld [vmem:[#allocation6 + $0x78] sm:$0xff]
    %v366 = vld [vmem:[%s5] sm:$0x1]
    %v368 = vperm.slane %v366, 0
    %370 = vmatpush.msra.mxu0 %v365
    %371 = vmatpush.msra.mxu0 %v364
    %372 = vmatpush.msra.mxu0 %v363
    %373 = vmatpush.msra.mxu0 %v362
    %374 = vmatpush.msra.mxu0 %v361
    %375 = vmatpush.msra.mxu0 %v360
    %376 = vmatpush.msra.mxu0 %v359
    %377 = vmatpush.msra.mxu0 %v358
    %378 = vmatpush.msra.mxu0 %v357
    %379 = vmatpush.msra.mxu0 %v356
    %380 = vmatpush.msra.mxu0 %v355
    %381 = vmatpush.msra.mxu0 %v354
    %382 = vmatpush.msra.mxu0 %v353
    %383 = vmatpush.msra.mxu0 %v352
    %384 = vmatpush.msra.mxu0 %v351
    %385 = vmatpush.msra.mxu0 %v350
    %386 = vmatmul.f32.gmra.mxu0 %v346
    %v387 = vpop.f32.mrf.mxu0
    %v388 = vadd.f32 %v368, %v387
    %389 = vmatmul.f32.gmra.mxu0 %v347
    %v390 = vpop.f32.mrf.mxu0
    %v391 = vadd.f32 %v368, %v390
    %392 = vmatmul.f32.gmra.mxu0 %v348
    %v393 = vpop.f32.mrf.mxu0
    %v394 = vadd.f32 %v368, %v393
    %395 = vmatmul.f32.gmra.mxu0 %v349
    %v396 = vpop.f32.mrf.mxu0
    %v397 = vadd.f32 %v368, %v396
    %398 = vdwg.mxu0
    %v399 = vsub.f32 %v388, %v225
    %v400 = vsub.f32 %v391, %v230
    %v401 = vsub.f32 %v394, %v235
    %v402 = vsub.f32 %v397, %v240
    %v403 = vld [vmem:[%s8] sm:$0xff]
    %v404 = vld [vmem:[%s8 + $0x8] sm:$0xff]
    %v405 = vld [vmem:[%s8 + $0x10] sm:$0xff]
    %v406 = vld [vmem:[%s8 + $0x18] sm:$0xff]
    %408 = vset.pattern.permute.xlu0 0
    %409 = vperm.xlu0 %408, %v403
    %v410 = vpop.permute.xlu0 %409
    %413 = vset.pattern.permute.xlu0 0
    %414 = vperm.xlu0 %413, %v404
    %v415 = vpop.permute.xlu0 %414
    %418 = vset.pattern.permute.xlu0 0
    %419 = vperm.xlu0 %418, %v405
    %v420 = vpop.permute.xlu0 %419
    %423 = vset.pattern.permute.xlu0 0
    %424 = vperm.xlu0 %423, %v406
    %v425 = vpop.permute.xlu0 %424
    %v427 = vmul.f32 %v399, %v410
    %v428 = vmul.f32 %v400, %v415
    %v429 = vmul.f32 %v401, %v420
    %v430 = vmul.f32 %v402, %v425
    %v431 = vmul.f32 %v427, %v182
    %v432 = vmul.f32 %v428, %v183
    %v433 = vmul.f32 %v429, %v184
    %v434 = vmul.f32 %v430, %v185
    %v435 = vadd.f32 %v431, %v110
    %v436 = vadd.f32 %v432, %v111
    %v437 = vadd.f32 %v433, %v112
    %v438 = vadd.f32 %v434, %v113
    %v439 = vld [vmem:[#allocation8] sm:$0xff]
    %v440 = vld [vmem:[#allocation8 + $0x8] sm:$0xff]
    %v441 = vld [vmem:[#allocation8 + $0x10] sm:$0xff]
    %v442 = vld [vmem:[#allocation8 + $0x18] sm:$0xff]
    %v443 = vld [vmem:[#allocation8 + $0x20] sm:$0xff]
    %v444 = vld [vmem:[#allocation8 + $0x28] sm:$0xff]
    %v445 = vld [vmem:[#allocation8 + $0x30] sm:$0xff]
    %v446 = vld [vmem:[#allocation8 + $0x38] sm:$0xff]
    %v447 = vld [vmem:[#allocation8 + $0x40] sm:$0xff]
    %v448 = vld [vmem:[#allocation8 + $0x48] sm:$0xff]
    %v449 = vld [vmem:[#allocation8 + $0x50] sm:$0xff]
    %v450 = vld [vmem:[#allocation8 + $0x58] sm:$0xff]
    %v451 = vld [vmem:[#allocation8 + $0x60] sm:$0xff]
    %v452 = vld [vmem:[#allocation8 + $0x68] sm:$0xff]
    %v453 = vld [vmem:[#allocation8 + $0x70] sm:$0xff]
    %v454 = vld [vmem:[#allocation8 + $0x78] sm:$0xff]
    %v455 = vld [vmem:[#allocation8 + $0x80] sm:$0xff]
    %v456 = vld [vmem:[#allocation8 + $0x88] sm:$0xff]
    %v457 = vld [vmem:[#allocation8 + $0x90] sm:$0xff]
    %v458 = vld [vmem:[#allocation8 + $0x98] sm:$0xff]
    %v459 = vld [vmem:[#allocation8 + $0xa0] sm:$0xff]
    %v460 = vld [vmem:[#allocation8 + $0xa8] sm:$0xff]
    %v461 = vld [vmem:[#allocation8 + $0xb0] sm:$0xff]
    %v462 = vld [vmem:[#allocation8 + $0xb8] sm:$0xff]
    %v463 = vld [vmem:[#allocation8 + $0xc0] sm:$0xff]
    %v464 = vld [vmem:[#allocation8 + $0xc8] sm:$0xff]
    %v465 = vld [vmem:[#allocation8 + $0xd0] sm:$0xff]
    %v466 = vld [vmem:[#allocation8 + $0xd8] sm:$0xff]
    %v467 = vld [vmem:[#allocation8 + $0xe0] sm:$0xff]
    %v468 = vld [vmem:[#allocation8 + $0xe8] sm:$0xff]
    %v469 = vld [vmem:[#allocation8 + $0xf0] sm:$0xff]
    %v470 = vld [vmem:[#allocation8 + $0xf8] sm:$0xff]
    %v471 = vld [vmem:[#allocation8 + $0x100] sm:$0xff]
    %v472 = vld [vmem:[#allocation8 + $0x108] sm:$0xff]
    %v473 = vld [vmem:[#allocation8 + $0x110] sm:$0xff]
    %v474 = vld [vmem:[#allocation8 + $0x118] sm:$0xff]
    %v475 = vld [vmem:[#allocation8 + $0x120] sm:$0xff]
    %v476 = vld [vmem:[#allocation8 + $0x128] sm:$0xff]
    %v477 = vld [vmem:[#allocation8 + $0x130] sm:$0xff]
    %v478 = vld [vmem:[#allocation8 + $0x138] sm:$0xff]
    %v479 = vld [vmem:[#allocation8 + $0x140] sm:$0xff]
    %v480 = vld [vmem:[#allocation8 + $0x148] sm:$0xff]
    %v481 = vld [vmem:[#allocation8 + $0x150] sm:$0xff]
    %v482 = vld [vmem:[#allocation8 + $0x158] sm:$0xff]
    %v483 = vld [vmem:[#allocation8 + $0x160] sm:$0xff]
    %v484 = vld [vmem:[#allocation8 + $0x168] sm:$0xff]
    %v485 = vld [vmem:[#allocation8 + $0x170] sm:$0xff]
    %v486 = vld [vmem:[#allocation8 + $0x178] sm:$0xff]
    %v487 = vld [vmem:[#allocation8 + $0x180] sm:$0xff]
    %v488 = vld [vmem:[#allocation8 + $0x188] sm:$0xff]
    %v489 = vld [vmem:[#allocation8 + $0x190] sm:$0xff]
    %v490 = vld [vmem:[#allocation8 + $0x198] sm:$0xff]
    %v491 = vld [vmem:[#allocation8 + $0x1a0] sm:$0xff]
    %v492 = vld [vmem:[#allocation8 + $0x1a8] sm:$0xff]
    %v493 = vld [vmem:[#allocation8 + $0x1b0] sm:$0xff]
    %v494 = vld [vmem:[#allocation8 + $0x1b8] sm:$0xff]
    %v495 = vld [vmem:[#allocation8 + $0x1c0] sm:$0xff]
    %v496 = vld [vmem:[#allocation8 + $0x1c8] sm:$0xff]
    %v497 = vld [vmem:[#allocation8 + $0x1d0] sm:$0xff]
    %v498 = vld [vmem:[#allocation8 + $0x1d8] sm:$0xff]
    %v499 = vld [vmem:[#allocation8 + $0x1e0] sm:$0xff]
    %v500 = vld [vmem:[#allocation8 + $0x1e8] sm:$0xff]
    %v501 = vld [vmem:[#allocation8 + $0x1f0] sm:$0xff]
    %v502 = vld [vmem:[#allocation8 + $0x1f8] sm:$0xff]
    %503 = vmatpush.msra.mxu0 %v454
    %504 = vmatpush.msra.mxu0 %v453
    %505 = vmatpush.msra.mxu0 %v452
    %506 = vmatpush.msra.mxu0 %v451
    %507 = vmatpush.msra.mxu0 %v450
    %508 = vmatpush.msra.mxu0 %v449
    %509 = vmatpush.msra.mxu0 %v448
    %510 = vmatpush.msra.mxu0 %v447
    %511 = vmatpush.msra.mxu0 %v446
    %512 = vmatpush.msra.mxu0 %v445
    %513 = vmatpush.msra.mxu0 %v444
    %514 = vmatpush.msra.mxu0 %v443
    %515 = vmatpush.msra.mxu0 %v442
    %516 = vmatpush.msra.mxu0 %v441
    %517 = vmatpush.msra.mxu0 %v440
    %518 = vmatpush.msra.mxu0 %v439
    %519 = vmatmul.f32.gmra.mxu0 %v435
    %v520 = vpop.f32.mrf.mxu0
    %v521 = vadd.f32 0.0, %v520
    %522 = vdwg.mxu0
    %523 = vmatpush.msra.mxu0 %v470
    %524 = vmatpush.msra.mxu0 %v469
    %525 = vmatpush.msra.mxu0 %v468
    %526 = vmatpush.msra.mxu0 %v467
    %527 = vmatpush.msra.mxu0 %v466
    %528 = vmatpush.msra.mxu0 %v465
    %529 = vmatpush.msra.mxu0 %v464
    %530 = vmatpush.msra.mxu0 %v463
    %531 = vmatpush.msra.mxu0 %v462
    %532 = vmatpush.msra.mxu0 %v461
    %533 = vmatpush.msra.mxu0 %v460
    %534 = vmatpush.msra.mxu0 %v459
    %535 = vmatpush.msra.mxu0 %v458
    %536 = vmatpush.msra.mxu0 %v457
    %537 = vmatpush.msra.mxu0 %v456
    %538 = vmatpush.msra.mxu0 %v455
    %539 = vmatmul.f32.gmra.mxu0 %v436
    %v540 = vpop.f32.mrf.mxu0
    %v541 = vadd.f32 %v521, %v540
    %542 = vdwg.mxu0
    %543 = vmatpush.msra.mxu0 %v486
    %544 = vmatpush.msra.mxu0 %v485
    %545 = vmatpush.msra.mxu0 %v484
    %546 = vmatpush.msra.mxu0 %v483
    %547 = vmatpush.msra.mxu0 %v482
    %548 = vmatpush.msra.mxu0 %v481
    %549 = vmatpush.msra.mxu0 %v480
    %550 = vmatpush.msra.mxu0 %v479
    %551 = vmatpush.msra.mxu0 %v478
    %552 = vmatpush.msra.mxu0 %v477
    %553 = vmatpush.msra.mxu0 %v476
    %554 = vmatpush.msra.mxu0 %v475
    %555 = vmatpush.msra.mxu0 %v474
    %556 = vmatpush.msra.mxu0 %v473
    %557 = vmatpush.msra.mxu0 %v472
    %558 = vmatpush.msra.mxu0 %v471
    %559 = vmatmul.f32.gmra.mxu0 %v437
    %v560 = vpop.f32.mrf.mxu0
    %v561 = vadd.f32 %v541, %v560
    %562 = vdwg.mxu0
    %563 = vmatpush.msra.mxu0 %v502
    %564 = vmatpush.msra.mxu0 %v501
    %565 = vmatpush.msra.mxu0 %v500
    %566 = vmatpush.msra.mxu0 %v499
    %567 = vmatpush.msra.mxu0 %v498
    %568 = vmatpush.msra.mxu0 %v497
    %569 = vmatpush.msra.mxu0 %v496
    %570 = vmatpush.msra.mxu0 %v495
    %571 = vmatpush.msra.mxu0 %v494
    %572 = vmatpush.msra.mxu0 %v493
    %573 = vmatpush.msra.mxu0 %v492
    %574 = vmatpush.msra.mxu0 %v491
    %575 = vmatpush.msra.mxu0 %v490
    %576 = vmatpush.msra.mxu0 %v489
    %577 = vmatpush.msra.mxu0 %v488
    %578 = vmatpush.msra.mxu0 %v487
    %579 = vmatmul.f32.gmra.mxu0 %v438
    %v580 = vpop.f32.mrf.mxu0
    %v581 = vadd.f32 %v561, %v580
    %582 = vdwg.mxu0
    %p583 = scmp.eq.s32.totalorder 0, 0
    // Predicated region
    $region58: #{tpu_custom_call.1} parent=1 // pred_check
      %p584 = pneg %p583
    $region59: #{tpu_custom_call.1} parent=1 // pred_check_branch
      %586 = sbr.rel (%p584) target = $region61
    $region60: #{tpu_custom_call.1} parent=1 // pred_region
      %587 = vst [vmem:[#allocation2] sm:$0xff] 0.0
    $region61: #{tpu_custom_call.1} parent=1 // pred_fallthru
      _
    %v588 = vld [vmem:[#allocation2] sm:$0xff]
    %v589 = vadd.f32 %v588, %v581
    %590 = vst [vmem:[#allocation2] sm:$0xff] %v589
    // Predicated region
    $region62: #{tpu_custom_call.1} parent=1 // pred_check
      %p591 = pneg %p583
    $region63: #{tpu_custom_call.1} parent=1 // pred_check_branch
      %593 = sbr.rel (%p591) target = $region65
    $region64: #{tpu_custom_call.1} parent=1 // pred_region
      %v594 = vld [vmem:[#allocation2] sm:$0xff]
      %v595 = vld [vmem:[%s10] sm:$0x1]
      %v597 = vperm.slane %v595, 0
      %v599 = vadd.f32 %v594, %v597
      %600 = vst [vmem:[#allocation9] sm:$0xff] %v599
    $region65: #{tpu_custom_call.1} parent=1 // pred_fallthru
      _
    // Predicated region
    $region66: #{tpu_custom_call.1} parent=1 // pred_check
      _
    $region67: #{tpu_custom_call.1} parent=1 // pred_check_branch
      %602 = sbr.rel (0) target = $region69
    $region68: #{tpu_custom_call.1} parent=1 // pred_region
      %604 = vsyncadd [#allocation5], 0
      %s606 = sshll.u32 [#allocation9], 4
      %s607 = int_to_ptr.vmem [resolvable:$true] %s606
      %s608 = sshll.u32 %s11, 4
      %s609 = int_to_ptr.hbm [resolvable:$true] %s608
      %611 = dma.vmem_to_hbm [thread:$0]  %s607, 128, %s609, [#allocation5]
    $region69: #{tpu_custom_call.1} parent=1 // pred_fallthru
      _
    // Predicated region
    $region70: #{tpu_custom_call.1} parent=1 // pred_check
      _
    $region71: #{tpu_custom_call.1} parent=1 // pred_check_branch
      %613 = sbr.rel (0) target = $region73
    $region72: #{tpu_custom_call.1} parent=1 // pred_region
      %615 = dma.done [#allocation5], 128
    $region73: #{tpu_custom_call.1} parent=1 // pred_fallthru
      _
    %616 = vsyncpa [#allocation4], 1
    %617 = vsyncpa [#allocation7], 1
    %618 = vsyncpa [#allocation5], 1

</llo_original>
